<compile_context>
chip_gen: v7x
topology: tpu7x:2x2x1
jax: 0.10.0
libtpu: 0.0.40
codegen_flags: <defaults>
</compile_context>

<pallas_src>
import functools

import jax
import jax.numpy as jnp
from jax.experimental import pallas as pl
from jax.experimental.pallas import tpu as pltpu


# fp32 temporaries the fused body keeps live per element (x_f32, x-mu / y, sigmoid)
_FUSED_TEMP_BYTES_PER_ELEM = 12


def _vmem_budget_bytes():
    """Usable VMEM budget for one pallas_call, generation aware (v7x = 64 MiB)."""
    try:
        cap = int(pltpu.get_tpu_info().vmem_capacity_bytes)
    except Exception:
        cap = 64 << 20                       # conservative default (v7x per-core VMEM)
    cap = max(min(cap, 128 << 20), 16 << 20)
    return (cap * 3) // 4                    # headroom for compiler scratch / spills


# ------------------------------ fused path ----------------------------------

def _simam_fused_kernel(x_ref, o_ref, *, N, n, e_lambda):
    x = x_ref[0].astype(jnp.float32)                          # (R, C)
    # One streaming sweep: sum and sum-of-squares (lane reduce, then sublane).
    s = jnp.sum(jnp.sum(x, axis=1, keepdims=True), axis=0, keepdims=True)
    ss = jnp.sum(jnp.sum(x * x, axis=1, keepdims=True), axis=0, keepdims=True)
    mu = s / N
    d_sum = jnp.maximum(ss - N * mu * mu, 0.0)                # == sum((x-mu)^2)
    inv_denom = 1.0 / (4.0 * (d_sum / n + e_lambda))          # per-batch scalar
    xm = x - mu
    y = xm * xm * inv_denom + 0.5
    o_ref[0] = (x + x * jax.nn.sigmoid(y)).astype(o_ref.dtype)


def _simam_fused(xv, e_lambda, vmem_limit):
    B, R, C = xv.shape
    N = float(R * C)
    kern = functools.partial(_simam_fused_kernel, N=N, n=max(N - 1.0, 1.0),
                             e_lambda=float(e_lambda))
    return pl.pallas_call(
        kern,
        out_shape=jax.ShapeDtypeStruct((B, R, C), xv.dtype),
        grid=(B,),
        in_specs=[pl.BlockSpec((1, R, C), lambda b: (b, 0, 0))],
        out_specs=pl.BlockSpec((1, R, C), lambda b: (b, 0, 0)),
        compiler_params=pltpu.CompilerParams(
            dimension_semantics=("parallel",),
            vmem_limit_bytes=int(vmem_limit)),
    )(xv)


# ------------------------------ tiled path -----------------------------------
# Pass 1: per-batch sum / sum-of-squares over row tiles; scalar finalize fused in.

def _simam_stats_kernel(x_ref, mu_ref, inv_ref, sum_acc, ss_acc,
                        *, R, TR, N, n, e_lambda, ragged):
    r = pl.program_id(1)

    @pl.when(r == 0)
    def _():
        sum_acc[...] = jnp.zeros_like(sum_acc)
        ss_acc[...] = jnp.zeros_like(ss_acc)

    x = x_ref[0].astype(jnp.float32)                          # (TR, C)
    if ragged:                                                # trace-time switch
        rows = jax.lax.broadcasted_iota(jnp.int32, x.shape, 0) + r * TR
        x = jnp.where(rows < R, x, 0.0)
    sum_acc[...] += jnp.sum(x, axis=0, keepdims=True)
    ss_acc[...] += jnp.sum(x * x, axis=0, keepdims=True)

    @pl.when(r == pl.num_programs(1) - 1)
    def _():
        s = jnp.sum(sum_acc[...], axis=1, keepdims=True)      # (1, 1)
        ss = jnp.sum(ss_acc[...], axis=1, keepdims=True)
        mu = s / N
        d_sum = jnp.maximum(ss - N * mu * mu, 0.0)
        mu_ref[0] = mu
        inv_ref[0] = 1.0 / (4.0 * (d_sum / n + e_lambda))


# Pass 2: elementwise apply; per-batch (mu, 1/denom) scalars live in tiny SMEM arrays.

def _simam_apply_kernel(mu_ref, inv_ref, x_ref, o_ref):
    b = pl.program_id(0)
    mu = mu_ref[b]
    inv_denom = inv_ref[b]
    x = x_ref[0].astype(jnp.float32)
    xm = x - mu
    y = xm * xm * inv_denom + 0.5
    o_ref[0] = (x + x * jax.nn.sigmoid(y)).astype(o_ref.dtype)


def _pick_tile_rows(R, C, itemsize, tile_rows=None):
    sub = 16 if itemsize == 2 else 8                          # sublane multiple
    if tile_rows is None:
        budget = 1 << 20                                      # ~1 MiB per input block
        tile_rows = max(budget // max(C * itemsize, 1), 1)
    tile_rows = int(tile_rows)
    if tile_rows >= R:
        return R
    tile_rows = max((tile_rows // sub) * sub, sub)
    return min(tile_rows, R)


def _simam_tiled(xv, e_lambda, vmem_limit, tile_rows=None):
    B, R, C = xv.shape
    itemsize = jnp.dtype(xv.dtype).itemsize
    TR = _pick_tile_rows(R, C, itemsize, tile_rows)
    nR = pl.cdiv(R, TR)
    N = float(R * C)
    n = max(N - 1.0, 1.0)

    stats_kern = functools.partial(
        _simam_stats_kernel, R=R, TR=TR, N=N, n=n,
        e_lambda=float(e_lambda), ragged=(R % TR != 0))

    mu, inv = pl.pallas_call(
        stats_kern,
        out_shape=(jax.ShapeDtypeStruct((B, 1, 1), jnp.float32),
                   jax.ShapeDtypeStruct((B, 1, 1), jnp.float32)),
        grid=(B, nR),
        in_specs=[pl.BlockSpec((1, TR, C), lambda b, r: (b, r, 0))],
        out_specs=(pl.BlockSpec((1, 1, 1), lambda b, r: (b, 0, 0)),
                   pl.BlockSpec((1, 1, 1), lambda b, r: (b, 0, 0))),
        scratch_shapes=[pltpu.VMEM((1, C), jnp.float32),
                        pltpu.VMEM((1, C), jnp.float32)],
        compiler_params=pltpu.CompilerParams(
            dimension_semantics=("parallel", "arbitrary"),
            vmem_limit_bytes=int(vmem_limit)),
    )(xv)

    mu = mu.reshape(B)                    # tiny 1-D per-batch scalars -> SMEM
    inv = inv.reshape(B)

    return pl.pallas_call(
        _simam_apply_kernel,
        out_shape=jax.ShapeDtypeStruct((B, R, C), xv.dtype),
        grid=(B, nR),
        in_specs=[pl.BlockSpec(memory_space=pltpu.MemorySpace.SMEM),
                  pl.BlockSpec(memory_space=pltpu.MemorySpace.SMEM),
                  pl.BlockSpec((1, TR, C), lambda b, r: (b, r, 0))],
        out_specs=pl.BlockSpec((1, TR, C), lambda b, r: (b, r, 0)),
        compiler_params=pltpu.CompilerParams(
            dimension_semantics=("parallel", "parallel"),
            vmem_limit_bytes=int(vmem_limit)),
    )(mu, inv, xv)


# ------------------------------ public wrapper --------------------------------

def _lane_dense_view(x, use_fused):
    """View each (H, W) slab as (R, C) with C a multiple of 128 when possible."""
    B, H, W = x.shape
    HW = H * W
    for c in (2048, 1024, 512, 256, 128):
        if HW % c == 0:
            return x.reshape(B, HW // c, c)
    if W % 128 == 0:
        return x                              # already lane-dense
    if use_fused:
        return x.reshape(B, 1, HW)            # small slab: one contiguous block
    # Rare fallback (huge slab with no 128-divisor and unaligned W): keep (B,H,W);
    # correct but stores are lane-masked.
    # TODO(synk): pad-free lane retiling for this corner case.
    return x


def simam_forward(x, e_lambda=1e-4, *, force_tiled=False, tile_rows=None):
    """SimAM forward.  x: (B, H, W) float array.  Matches the PyTorch module."""
    B, H, W = x.shape
    HW = H * W
    itemsize = jnp.dtype(x.dtype).itemsize

    usable = _vmem_budget_bytes()
    # Fused-path VMEM need: double-buffered in + out blocks plus fp32 temporaries.
    fused_need = HW * (4 * itemsize + _FUSED_TEMP_BYTES_PER_ELEM)
    use_fused = (not force_tiled) and (fused_need <= usable)

    xv = _lane_dense_view(x, use_fused)
    if use_fused:
        out = _simam_fused(xv, e_lambda, vmem_limit=usable)
    else:
        out = _simam_tiled(xv, e_lambda, vmem_limit=usable, tile_rows=tile_rows)
    return out.reshape(B, H, W)


# ------------------------------ reference & test ------------------------------

def _simam_reference(x, e_lambda=1e-4):
    _, h, w = x.shape
    n = h * w - 1
    mu = jnp.mean(x, axis=(1, 2), keepdims=True)
    d = jnp.square(x - mu)
    y = d / (4.0 * (jnp.sum(d, axis=(1, 2), keepdims=True) / n + e_lambda)) + 0.5
    return x + x * jax.nn.sigmoid(y)


if __name__ == "__main__":
    key = jax.random.PRNGKey(0)
    k1, k2, k3, k4 = jax.random.split(key, 4)

    # (b, h, w) inputs as the PyTorch module expects
    x1 = jax.random.normal(k1, (2, 16, 128), dtype=jnp.float32)        # H*W % 2048 == 0
    x2 = jax.random.normal(k2, (2, 12, 33), dtype=jnp.float32)         # odd dims
    x3 = jax.random.normal(k3, (2, 40, 48), dtype=jnp.float32) + 3.0   # non-zero mean

    ref1 = _simam_reference(x1)
    ref2 = _simam_reference(x2)
    ref3 = _simam_reference(x3)

    # fused, lane-dense path
    out1 = jax.block_until_ready(simam_forward(x1))
    assert out1.shape == x1.shape
    assert bool(jnp.all(jnp.isfinite(out1)))
    assert bool(jnp.allclose(out1, ref1, rtol=1e-5, atol=1e-5))

    # fused path on odd dims (flattened to (B, 1, H*W))
    out2 = jax.block_until_ready(simam_forward(x2))
    assert bool(jnp.allclose(out2, ref2, rtol=1e-5, atol=1e-5))

    # tiled two-pass path: lane-dense C=128, ragged last row tile, non-zero mean
    out3 = jax.block_until_ready(simam_forward(x3, force_tiled=True, tile_rows=8))
    assert bool(jnp.allclose(out3, ref3, rtol=1e-4, atol=1e-4))

    # tiled fallback layout (W not lane-aligned, no 128 divisor of H*W)
    x4 = jax.random.normal(k4, (2, 24, 33), dtype=jnp.float32)
    out4 = jax.block_until_ready(simam_forward(x4, force_tiled=True, tile_rows=8))
    assert bool(jnp.allclose(out4, _simam_reference(x4), rtol=1e-4, atol=1e-4))

    # bf16 activations (half HBM traffic); stats still accumulate in fp32
    xb = x1.astype(jnp.bfloat16)
    outb = jax.block_until_ready(simam_forward(xb))
    assert outb.dtype == jnp.bfloat16
    refb = _simam_reference(xb.astype(jnp.float32))
    assert bool(jnp.allclose(outb.astype(jnp.float32), refb, rtol=5e-2, atol=5e-2))

    print("KERNEL_OK")
</pallas_src>

<mosaic_0001>
module attributes {stable_mosaic.version = 11 : i64} {
  func.func @_simam_fused_kernel(%arg0: i32, %arg1: memref<1x1x2048xf32, #tpu.memory_space<vmem>>, %arg2: memref<1x1x2048xf32, #tpu.memory_space<vmem>>) attributes {dimension_semantics = [#tpu.dimension_semantics<parallel>], iteration_bounds = array<i64: 2>, scalar_prefetch = 0 : i64, scratch_operands = 0 : i64, tpu.core_type = #tpu.core_type<tc>, window_params = [{transform_indices = @transform_0, window_bounds = array<i64: 1, 1, 2048>}, {transform_indices = @transform_1, window_bounds = array<i64: 1, 1, 2048>}]} {
    %c0 = arith.constant 0 : index
    %c0_0 = arith.constant 0 : index
    %c0_1 = arith.constant 0 : index
    %0 = vector.load %arg1[%c0, %c0_0, %c0_1] : memref<1x1x2048xf32, #tpu.memory_space<vmem>>, vector<1x1x2048xf32>
    %1 = vector.shape_cast %0 : vector<1x1x2048xf32> to vector<1x2048xf32>
    %cst = arith.constant dense<0.000000e+00> : vector<1xf32>
    %2 = vector.multi_reduction <add>, %1, %cst [1] : vector<1x2048xf32> to vector<1xf32>
    %3 = vector.shape_cast %2 : vector<1xf32> to vector<1x1xf32>
    %cst_2 = arith.constant dense<0.000000e+00> : vector<1xf32>
    %4 = vector.multi_reduction <add>, %3, %cst_2 [0] : vector<1x1xf32> to vector<1xf32>
    %5 = vector.shape_cast %4 : vector<1xf32> to vector<1x1xf32>
    %6 = arith.mulf %1, %1 : vector<1x2048xf32>
    %cst_3 = arith.constant dense<0.000000e+00> : vector<1xf32>
    %7 = vector.multi_reduction <add>, %6, %cst_3 [1] : vector<1x2048xf32> to vector<1xf32>
    %8 = vector.shape_cast %7 : vector<1xf32> to vector<1x1xf32>
    %cst_4 = arith.constant dense<0.000000e+00> : vector<1xf32>
    %9 = vector.multi_reduction <add>, %8, %cst_4 [0] : vector<1x1xf32> to vector<1xf32>
    %10 = vector.shape_cast %9 : vector<1xf32> to vector<1x1xf32>
    %cst_5 = arith.constant 2.048000e+03 : f32
    %11 = vector.broadcast %cst_5 : f32 to vector<1x1xf32>
    %12 = arith.divf %5, %11 : vector<1x1xf32>
    %cst_6 = arith.constant 2.048000e+03 : f32
    %13 = vector.broadcast %cst_6 : f32 to vector<1x1xf32>
    %14 = arith.mulf %13, %12 : vector<1x1xf32>
    %15 = arith.mulf %14, %12 : vector<1x1xf32>
    %16 = arith.subf %10, %15 : vector<1x1xf32>
    %cst_7 = arith.constant 0.000000e+00 : f32
    %17 = vector.broadcast %cst_7 : f32 to vector<1x1xf32>
    %18 = arith.maximumf %16, %17 : vector<1x1xf32>
    %cst_8 = arith.constant 2.047000e+03 : f32
    %19 = vector.broadcast %cst_8 : f32 to vector<1x1xf32>
    %20 = arith.divf %18, %19 : vector<1x1xf32>
    %cst_9 = arith.constant 9.99999974E-5 : f32
    %21 = vector.broadcast %cst_9 : f32 to vector<1x1xf32>
    %22 = arith.addf %20, %21 : vector<1x1xf32>
    %cst_10 = arith.constant 4.000000e+00 : f32
    %23 = vector.broadcast %cst_10 : f32 to vector<1x1xf32>
    %24 = arith.mulf %23, %22 : vector<1x1xf32>
    %cst_11 = arith.constant 1.000000e+00 : f32
    %25 = vector.broadcast %cst_11 : f32 to vector<1x1xf32>
    %26 = arith.divf %25, %24 : vector<1x1xf32>
    %27 = vector.broadcast %12 : vector<1x1xf32> to vector<1x2048xf32>
    %28 = arith.subf %1, %27 : vector<1x2048xf32>
    %29 = arith.mulf %28, %28 : vector<1x2048xf32>
    %30 = vector.broadcast %26 : vector<1x1xf32> to vector<1x2048xf32>
    %31 = arith.mulf %29, %30 : vector<1x2048xf32>
    %cst_12 = arith.constant 5.000000e-01 : f32
    %32 = vector.broadcast %cst_12 : f32 to vector<1x2048xf32>
    %33 = arith.addf %31, %32 : vector<1x2048xf32>
    %34 = arith.negf %33 : vector<1x2048xf32>
    %35 = math.exp %34 : vector<1x2048xf32>
    %cst_13 = arith.constant 1.000000e+00 : f32
    %36 = vector.broadcast %cst_13 : f32 to vector<1x2048xf32>
    %37 = arith.addf %36, %35 : vector<1x2048xf32>
    %38 = arith.divf %36, %37 : vector<1x2048xf32>
    %39 = arith.mulf %1, %38 : vector<1x2048xf32>
    %40 = arith.addf %1, %39 : vector<1x2048xf32>
    %c0_14 = arith.constant 0 : index
    %c0_15 = arith.constant 0 : index
    %c0_16 = arith.constant 0 : index
    %41 = vector.load %arg2[%c0_14, %c0_15, %c0_16] : memref<1x1x2048xf32, #tpu.memory_space<vmem>>, vector<1x1x2048xf32>
    %42 = vector.shape_cast %41 : vector<1x1x2048xf32> to vector<1x2048xf32>
    %43 = vector.shape_cast %40 : vector<1x2048xf32> to vector<1x1x2048xf32>
    tpu.vector_store %arg2[%c0_14, %c0_15, %c0_16], %43 {strides = array<i32>} : memref<1x1x2048xf32, #tpu.memory_space<vmem>>, vector<1x1x2048xf32>,
    return
  }
  func.func @transform_0(%arg0: i32) -> (i32, i32, i32) {
    %c0_i32 = arith.constant 0 : i32
    %c0_i32_0 = arith.constant 0 : i32
    %c0_i32_1 = arith.constant 0 : i32
    return %arg0, %c0_i32, %c0_i32_0 : i32, i32, i32
  }
  func.func @transform_1(%arg0: i32) -> (i32, i32, i32) {
    %c0_i32 = arith.constant 0 : i32
    %c0_i32_0 = arith.constant 0 : i32
    %c0_i32_1 = arith.constant 0 : i32
    return %arg0, %c0_i32, %c0_i32_0 : i32, i32, i32
  }
}

</mosaic_0001>

<llo_original>
// kernel: tpu_custom_call.1
$region0: #{tpu_custom_call.1}
  #allocation0 [shape = 'u32[]', space=smem, size = 0x4, offset = 0x4, fixed_abs, tag = 'smem constant byte address 0x4 - core index']
  #allocation1 [shape = 'u32[144,128]{1,0:T(1,128)}', space=vmem, size = 0x12000, scoped, tag = 'internal scratch']
  %s0 = inlined_call_operand.hbm [shape: f32[2,1,2048], index: 0, kind: input, shape index: {}]
  %s1 = inlined_call_operand.hbm [shape: f32[2,1,2048], index: 1, kind: output, shape index: {}]
  %s2 = sld [smem:[#allocation0]]
  $region41: #{tpu_custom_call.1} parent=0
    _
  %s4 = ssub.s32 1, %s2
  %s5 = scalar_select 0, %s4, %s2
  $region1: #{tpu_custom_call.1} parent=0
    #allocation2 [shape = 'u8[16384]{0}', space=vmem, size = 0x4000, scoped, tag = 'input window, operand 0']
    #allocation3 [shape = 's32[2]{0}', space=sflag, size = 0x8, scoped, tag = 'scoped memory for tpu_custom_call.1']
    #allocation4 [shape = 's32[2]{0}', space=sflag, size = 0x8, scoped, tag = 'scoped memory for tpu_custom_call.1']
    #allocation5 [shape = 'u8[16384]{0}', space=vmem, size = 0x4000, scoped, tag = 'output window, operand 0']
    %6 = vsyncpa [#allocation3], 0
    %s7 = scalar_lea.sflag [#allocation3], 1
    %8 = vsyncpa %s7, 0
    %9 = vsyncpa [#allocation4], 0
    %s10 = scalar_lea.sflag [#allocation4], 1
    %11 = vsyncpa %s10, 0
    loop: start=0, step=1, limit=4
    $region2: #{tpu_custom_call.1} parent=1 // loop_pre_header
      _
    $region3: #{tpu_custom_call.1} parent=1 // loop_header
      %s13 = sphi 0, %s17
      %p14 = scmp.ge.s32.totalorder %s13, 4
      %s23 = sphi 0, %s25
      %s26 = sphi 0, %s23
      %s27 = sphi 0, %s26
      %s43 = sphi 0, %s27
      %s49 = sphi 0, %s51
      %s52 = sphi 0, %s49
      %s53 = sphi 0, %s52
      %s69 = sphi 0, %s53
    $region4: #{tpu_custom_call.1} parent=1 // loop_header_branch
      %16 = sbr.rel (%p14) target = $region8
    $region5: #{tpu_custom_call.1} parent=1 // loop_body
      %s18 = ssub.s32 %s13, 1
      %s19 = ssub.s32 %s13, 2
      %s20 = sadd.s32 %s13, 1
      %s21 = ssub.s32 %s13, %s20
      %p22 = scmp.eq.s32.totalorder %s21, 0
      %s24 = sadd.s32 %s23, 1
      %s25 = scalar_select %p22, %s23, %s24
      %p28 = pneg %p22
      %p29 = scmp.eq.s32.totalorder %s13, 1
      %p30 = por %p28, %p29
      %p31 = scmp.ne.s32.totalorder %s23, %s26
      %p32 = scmp.eq.s32.totalorder %s13, 0
      %p33 = por %p31, %p32
      %p34 = scmp.ne.s32.totalorder %s23, %s26
      %p35 = scmp.eq.s32.totalorder %s18, 1
      %p36 = por %p34, %p35
      %p37 = scmp.ne.s32.totalorder %s26, %s27
      %p38 = scmp.eq.s32.totalorder %s18, 0
      %p39 = por %p37, %p38
      %p40 = scmp.ne.s32.totalorder %s26, %s27
      %p41 = scmp.eq.s32.totalorder %s19, 1
      %p42 = por %p40, %p41
      %p44 = scmp.ne.s32.totalorder %s27, %s43
      %p45 = scmp.eq.s32.totalorder %s19, 0
      %p46 = por %p44, %p45
      %s47 = ssub.s32 %s13, %s20
      %p48 = scmp.eq.s32.totalorder %s47, 0
      %s50 = sadd.s32 %s49, 1
      %s51 = scalar_select %p48, %s49, %s50
      %p54 = pneg %p48
      %p55 = scmp.eq.s32.totalorder %s13, 1
      %p56 = por %p54, %p55
      %p57 = scmp.ne.s32.totalorder %s49, %s52
      %p58 = scmp.eq.s32.totalorder %s13, 0
      %p59 = por %p57, %p58
      %p60 = scmp.ne.s32.totalorder %s49, %s52
      %p61 = scmp.eq.s32.totalorder %s18, 1
      %p62 = por %p60, %p61
      %p63 = scmp.ne.s32.totalorder %s52, %s53
      %p64 = scmp.eq.s32.totalorder %s18, 0
      %p65 = por %p63, %p64
      %p66 = scmp.ne.s32.totalorder %s52, %s53
      %p67 = scmp.eq.s32.totalorder %s19, 1
      %p68 = por %p66, %p67
      %p70 = scmp.ne.s32.totalorder %s53, %s69
      %p71 = scmp.eq.s32.totalorder %s19, 0
      %p72 = por %p70, %p71
      %p73 = scmp.le.s32.totalorder 1, %s13
      %p74 = scmp.lt.s32.totalorder %s13, 3
      %p75 = pnand %p73, %p74
      %p76 = pneg %p75
      // Predicated region
      $region9: #{tpu_custom_call.1} parent=5 // pred_check
        _
      $region10: #{tpu_custom_call.1} parent=5 // pred_check_branch
        %78 = sbr.rel (%p75) target = $region12
      $region11: #{tpu_custom_call.1} parent=5 // pred_region
        %s79 = ssub.s32 %s13, 1
      $region12: #{tpu_custom_call.1} parent=5 // pred_fallthru
        _
      %p80 = scmp.lt.s32.totalorder %s13, 2
      // Predicated region
      $region13: #{tpu_custom_call.1} parent=5 // pred_check
        %p81 = pneg %p80
      $region14: #{tpu_custom_call.1} parent=5 // pred_check_branch
        %83 = sbr.rel (%p81) target = $region16
      $region15: #{tpu_custom_call.1} parent=5 // pred_region
        // Predicated region
        $region17: #{tpu_custom_call.1} parent=15 // pred_check
          %p84 = pneg %p33
        $region18: #{tpu_custom_call.1} parent=15 // pred_check_branch
          %86 = sbr.rel (%p84) target = $region20
        $region19: #{tpu_custom_call.1} parent=15 // pred_region
          %s87 = sand.u32 %s23, 1
          %s88 = scalar_lea.sflag [#allocation3], %s87
          %s89 = sand.u32 %s23, 1
          %s90 = smul.addr %s89, 16
          %s91 = scalar_lea.vmem [#allocation2], %s90
          %s93 = ssub.s32 256, 256
          %94 = vsyncadd %s88, %s93
          %s95 = smul.addr %s13, 16
          %s96 = smul.addr %s95, 16
          %s97 = scalar_lea.hbm %s0, %s96
          %s99 = sshll.u32 %s91, 4
          %s100 = int_to_ptr.vmem [resolvable:$true] %s99
          %102 = dma.hbm_to_vmem [thread:$0]  %s97, 256, %s100, %s88
        $region20: #{tpu_custom_call.1} parent=15 // pred_fallthru
          _
      $region16: #{tpu_custom_call.1} parent=5 // pred_fallthru
        _
      %p103 = scmp.le.s32.totalorder 1, %s13
      %p104 = scmp.lt.s32.totalorder %s13, 3
      %p105 = pnand %p103, %p104
      %p106 = pneg %p105
      // Predicated region
      $region21: #{tpu_custom_call.1} parent=5 // pred_check
        _
      $region22: #{tpu_custom_call.1} parent=5 // pred_check_branch
        %108 = sbr.rel (%p105) target = $region24
      $region23: #{tpu_custom_call.1} parent=5 // pred_region
        %s109 = ssub.s32 %s13, 1
        %s110 = sand.u32 %s26, 1
        %s111 = scalar_lea.sflag [#allocation3], %s110
        %s112 = sand.u32 %s26, 1
        %s113 = smul.addr %s112, 16
        %s114 = scalar_lea.vmem [#allocation2], %s113
        // Predicated region
        $region25: #{tpu_custom_call.1} parent=23 // pred_check
          %p115 = pneg %p39
        $region26: #{tpu_custom_call.1} parent=23 // pred_check_branch
          %117 = sbr.rel (%p115) target = $region28
        $region27: #{tpu_custom_call.1} parent=23 // pred_region
          %118 = dma.done %s111, 256
        $region28: #{tpu_custom_call.1} parent=23 // pred_fallthru
          _
        %s119 = sand.u32 %s26, 1
        %s120 = scalar_lea.sflag [#allocation3], %s119
        %s121 = sand.u32 %s26, 1
        %s122 = smul.addr %s121, 16
        %s123 = scalar_lea.vmem [#allocation2], %s122
        %p124 = pneg %p39
        %p125 = pneg %p36
        %p126 = pneg %p65
        %p127 = pneg %p62
        %s128 = sand.u32 %s52, 1
        %s129 = scalar_lea.sflag [#allocation4], %s128
        %s130 = sand.u32 %s52, 1
        %s131 = smul.addr %s130, 16
        %s132 = scalar_lea.vmem [#allocation5], %s131
        %v133 = vld [vmem:[%s114] sm:$0xff]
        %v134 = vld [vmem:[%s114 + $0x8] sm:$0xff]
        %v137 = vlaneseq
        %v138 = vshrl.u32 %v137, 7
        %v139 = vsub.s32 0, %v138
        %v140 = vrot.slane %v133, %v139
        %v141 = vlaneseq
        %v142 = vshrl.u32 %v141, 7
        %v143 = vsub.s32 1, %v142
        %v144 = vrot.slane %v133, %v143
        %v145 = vlaneseq
        %v146 = vshrl.u32 %v145, 7
        %v147 = vsub.s32 2, %v146
        %v148 = vrot.slane %v133, %v147
        %v149 = vlaneseq
        %v150 = vshrl.u32 %v149, 7
        %v151 = vsub.s32 3, %v150
        %v152 = vrot.slane %v133, %v151
        %v153 = vlaneseq
        %v154 = vshrl.u32 %v153, 7
        %v155 = vsub.s32 4, %v154
        %v156 = vrot.slane %v133, %v155
        %v157 = vlaneseq
        %v158 = vshrl.u32 %v157, 7
        %v159 = vsub.s32 5, %v158
        %v160 = vrot.slane %v133, %v159
        %v161 = vlaneseq
        %v162 = vshrl.u32 %v161, 7
        %v163 = vsub.s32 6, %v162
        %v164 = vrot.slane %v133, %v163
        %v165 = vlaneseq
        %v166 = vshrl.u32 %v165, 7
        %v167 = vsub.s32 7, %v166
        %v168 = vrot.slane %v133, %v167
        %v169 = vlaneseq
        %v170 = vshrl.u32 %v169, 7
        %v171 = vsub.s32 0, %v170
        %v172 = vrot.slane %v134, %v171
        %v173 = vlaneseq
        %v174 = vshrl.u32 %v173, 7
        %v175 = vsub.s32 1, %v174
        %v176 = vrot.slane %v134, %v175
        %v177 = vlaneseq
        %v178 = vshrl.u32 %v177, 7
        %v179 = vsub.s32 2, %v178
        %v180 = vrot.slane %v134, %v179
        %v181 = vlaneseq
        %v182 = vshrl.u32 %v181, 7
        %v183 = vsub.s32 3, %v182
        %v184 = vrot.slane %v134, %v183
        %v185 = vlaneseq
        %v186 = vshrl.u32 %v185, 7
        %v187 = vsub.s32 4, %v186
        %v188 = vrot.slane %v134, %v187
        %v189 = vlaneseq
        %v190 = vshrl.u32 %v189, 7
        %v191 = vsub.s32 5, %v190
        %v192 = vrot.slane %v134, %v191
        %v193 = vlaneseq
        %v194 = vshrl.u32 %v193, 7
        %v195 = vsub.s32 6, %v194
        %v196 = vrot.slane %v134, %v195
        %v197 = vlaneseq
        %v198 = vshrl.u32 %v197, 7
        %v199 = vsub.s32 7, %v198
        %v200 = vrot.slane %v134, %v199
        %vm217 = vcmask 1040384
        %v218 = vsel %vm217, %v140, 0.0
        %v219 = vsel %vm217, %v144, 0.0
        %v220 = vadd.f32 %v218, %v219
        %v221 = vsel %vm217, %v148, 0.0
        %v222 = vadd.f32 %v220, %v221
        %v223 = vsel %vm217, %v152, 0.0
        %v224 = vadd.f32 %v222, %v223
        %v225 = vsel %vm217, %v156, 0.0
        %v226 = vadd.f32 %v224, %v225
        %v227 = vsel %vm217, %v160, 0.0
        %v228 = vadd.f32 %v226, %v227
        %v229 = vsel %vm217, %v164, 0.0
        %v230 = vadd.f32 %v228, %v229
        %v231 = vsel %vm217, %v168, 0.0
        %v232 = vadd.f32 %v230, %v231
        %v233 = vsel %vm217, %v172, 0.0
        %v234 = vadd.f32 %v232, %v233
        %v235 = vsel %vm217, %v176, 0.0
        %v236 = vadd.f32 %v234, %v235
        %v237 = vsel %vm217, %v180, 0.0
        %v238 = vadd.f32 %v236, %v237
        %v239 = vsel %vm217, %v184, 0.0
        %v240 = vadd.f32 %v238, %v239
        %v241 = vsel %vm217, %v188, 0.0
        %v242 = vadd.f32 %v240, %v241
        %v243 = vsel %vm217, %v192, 0.0
        %v244 = vadd.f32 %v242, %v243
        %v245 = vsel %vm217, %v196, 0.0
        %v246 = vadd.f32 %v244, %v245
        %v247 = vsel %vm217, %v200, 0.0
        %v248 = vadd.f32 %v246, %v247
        %249 = vadd.xlane.f32.xlu0 %v248
        %v250 = vpop.xlane.xlu0 %249
        %v251 = vadd.f32 %v250, 0.0
        %v252 = vmul.f32 %v133, %v133
        %v253 = vmul.f32 %v134, %v134
        %v256 = vlaneseq
        %v257 = vshrl.u32 %v256, 7
        %v258 = vsub.s32 0, %v257
        %v259 = vrot.slane %v252, %v258
        %v260 = vlaneseq
        %v261 = vshrl.u32 %v260, 7
        %v262 = vsub.s32 1, %v261
        %v263 = vrot.slane %v252, %v262
        %v264 = vlaneseq
        %v265 = vshrl.u32 %v264, 7
        %v266 = vsub.s32 2, %v265
        %v267 = vrot.slane %v252, %v266
        %v268 = vlaneseq
        %v269 = vshrl.u32 %v268, 7
        %v270 = vsub.s32 3, %v269
        %v271 = vrot.slane %v252, %v270
        %v272 = vlaneseq
        %v273 = vshrl.u32 %v272, 7
        %v274 = vsub.s32 4, %v273
        %v275 = vrot.slane %v252, %v274
        %v276 = vlaneseq
        %v277 = vshrl.u32 %v276, 7
        %v278 = vsub.s32 5, %v277
        %v279 = vrot.slane %v252, %v278
        %v280 = vlaneseq
        %v281 = vshrl.u32 %v280, 7
        %v282 = vsub.s32 6, %v281
        %v283 = vrot.slane %v252, %v282
        %v284 = vlaneseq
        %v285 = vshrl.u32 %v284, 7
        %v286 = vsub.s32 7, %v285
        %v287 = vrot.slane %v252, %v286
        %v288 = vlaneseq
        %v289 = vshrl.u32 %v288, 7
        %v290 = vsub.s32 0, %v289
        %v291 = vrot.slane %v253, %v290
        %v292 = vlaneseq
        %v293 = vshrl.u32 %v292, 7
        %v294 = vsub.s32 1, %v293
        %v295 = vrot.slane %v253, %v294
        %v296 = vlaneseq
        %v297 = vshrl.u32 %v296, 7
        %v298 = vsub.s32 2, %v297
        %v299 = vrot.slane %v253, %v298
        %v300 = vlaneseq
        %v301 = vshrl.u32 %v300, 7
        %v302 = vsub.s32 3, %v301
        %v303 = vrot.slane %v253, %v302
        %v304 = vlaneseq
        %v305 = vshrl.u32 %v304, 7
        %v306 = vsub.s32 4, %v305
        %v307 = vrot.slane %v253, %v306
        %v308 = vlaneseq
        %v309 = vshrl.u32 %v308, 7
        %v310 = vsub.s32 5, %v309
        %v311 = vrot.slane %v253, %v310
        %v312 = vlaneseq
        %v313 = vshrl.u32 %v312, 7
        %v314 = vsub.s32 6, %v313
        %v315 = vrot.slane %v253, %v314
        %v316 = vlaneseq
        %v317 = vshrl.u32 %v316, 7
        %v318 = vsub.s32 7, %v317
        %v319 = vrot.slane %v253, %v318
        %v336 = vsel %vm217, %v259, 0.0
        %v337 = vsel %vm217, %v263, 0.0
        %v338 = vadd.f32 %v336, %v337
        %v339 = vsel %vm217, %v267, 0.0
        %v340 = vadd.f32 %v338, %v339
        %v341 = vsel %vm217, %v271, 0.0
        %v342 = vadd.f32 %v340, %v341
        %v343 = vsel %vm217, %v275, 0.0
        %v344 = vadd.f32 %v342, %v343
        %v345 = vsel %vm217, %v279, 0.0
        %v346 = vadd.f32 %v344, %v345
        %v347 = vsel %vm217, %v283, 0.0
        %v348 = vadd.f32 %v346, %v347
        %v349 = vsel %vm217, %v287, 0.0
        %v350 = vadd.f32 %v348, %v349
        %v351 = vsel %vm217, %v291, 0.0
        %v352 = vadd.f32 %v350, %v351
        %v353 = vsel %vm217, %v295, 0.0
        %v354 = vadd.f32 %v352, %v353
        %v355 = vsel %vm217, %v299, 0.0
        %v356 = vadd.f32 %v354, %v355
        %v357 = vsel %vm217, %v303, 0.0
        %v358 = vadd.f32 %v356, %v357
        %v359 = vsel %vm217, %v307, 0.0
        %v360 = vadd.f32 %v358, %v359
        %v361 = vsel %vm217, %v311, 0.0
        %v362 = vadd.f32 %v360, %v361
        %v363 = vsel %vm217, %v315, 0.0
        %v364 = vadd.f32 %v362, %v363
        %v365 = vsel %vm217, %v319, 0.0
        %v366 = vadd.f32 %v364, %v365
        %367 = vadd.xlane.f32.xlu0 %v366
        %v368 = vpop.xlane.xlu0 %367
        %v369 = vadd.f32 %v368, 0.0
        %v370 = vrcp.pop 2048.0
        %v371 = vmul.f32 %v251, %v370
        %v372 = vmul.f32 %v371, 2048.0
        %v373 = vmul.f32 %v372, %v371
        %v374 = vsub.f32 %v369, %v373
        %v375 = vmax.f32 %v374, 0.0
        %v376 = vrcp.pop 2047.0
        %v377 = vmul.f32 %v375, %v376
        %v378 = vadd.f32 %v377, 0.0001
        %v379 = vmul.f32 %v378, 4.0
        %v380 = vrcp.pop %v379
        %v381 = vmul.f32 1.0, %v380
        %v383 = vlaneseq
        %v384 = vshrl.u32 %v383, 7
        %v385 = vsub.s32 0, %v384
        %v386 = vrot.slane %v371, %v385
        %v388 = vsub.f32 %v133, %v386
        %v389 = vsub.f32 %v134, %v386
        %v390 = vmul.f32 %v388, %v388
        %v391 = vmul.f32 %v389, %v389
        %v393 = vlaneseq
        %v394 = vshrl.u32 %v393, 7
        %v395 = vsub.s32 0, %v394
        %v396 = vrot.slane %v381, %v395
        %v398 = vmul.f32 %v390, %v396
        %v399 = vmul.f32 %v391, %v396
        %v400 = vadd.f32 %v398, 0.5
        %v401 = vadd.f32 %v399, 0.5
        %v402 = vxor.u32 %v400, 2147483648
        %v403 = vxor.u32 %v401, 2147483648
        %v404 = vmul.f32 %v402, 1.442695
        %v405 = vpow.pop %v404
        %v406 = vmul.f32 %v403, 1.442695
        %v407 = vpow.pop %v406
        %v408 = vadd.f32 %v405, 1.0
        %v409 = vadd.f32 %v407, 1.0
        %v410 = vrcp.pop %v408
        %v411 = vmul.f32 1.0, %v410
        %v412 = vrcp.pop %v409
        %v413 = vmul.f32 1.0, %v412
        %v414 = vmul.f32 %v133, %v411
        %v415 = vmul.f32 %v134, %v413
        %v416 = vadd.f32 %v133, %v414
        %v417 = vadd.f32 %v134, %v415
        %418 = vst [vmem:[%s132] sm:$0xff] %v416
        %419 = vst [vmem:[%s132 + $0x8] sm:$0xff] %v417
        %s420 = sand.u32 %s52, 1
        %s421 = scalar_lea.sflag [#allocation4], %s420
        %s422 = sand.u32 %s52, 1
        %s423 = smul.addr %s422, 16
        %s424 = scalar_lea.vmem [#allocation5], %s423
        // Predicated region
        $region29: #{tpu_custom_call.1} parent=23 // pred_check
          %p425 = pneg %p62
        $region30: #{tpu_custom_call.1} parent=23 // pred_check_branch
          %427 = sbr.rel (%p425) target = $region32
        $region31: #{tpu_custom_call.1} parent=23 // pred_region
          %s429 = ssub.s32 256, 256
          %430 = vsyncadd %s421, %s429
          %s431 = smul.addr %s18, 16
          %s432 = smul.addr %s431, 16
          %s433 = scalar_lea.hbm %s1, %s432
          %s435 = sshll.u32 %s424, 4
          %s436 = int_to_ptr.vmem [resolvable:$true] %s435
          %438 = dma.vmem_to_hbm [thread:$0]  %s436, 256, %s433, %s421
        $region32: #{tpu_custom_call.1} parent=23 // pred_fallthru
          _
      $region24: #{tpu_custom_call.1} parent=5 // pred_fallthru
        _
      %p439 = scmp.le.s32.totalorder 2, %s13
      // Predicated region
      $region33: #{tpu_custom_call.1} parent=5 // pred_check
        %p440 = pneg %p439
      $region34: #{tpu_custom_call.1} parent=5 // pred_check_branch
        %442 = sbr.rel (%p440) target = $region36
      $region35: #{tpu_custom_call.1} parent=5 // pred_region
        %s443 = ssub.s32 %s13, 2
        // Predicated region
        $region37: #{tpu_custom_call.1} parent=35 // pred_check
          %p444 = pneg %p68
        $region38: #{tpu_custom_call.1} parent=35 // pred_check_branch
          %446 = sbr.rel (%p444) target = $region40
        $region39: #{tpu_custom_call.1} parent=35 // pred_region
          %s447 = sand.u32 %s53, 1
          %s448 = scalar_lea.sflag [#allocation4], %s447
          %s449 = sand.u32 %s53, 1
          %s450 = smul.addr %s449, 16
          %s451 = scalar_lea.vmem [#allocation5], %s450
          %452 = dma.done %s448, 256
        $region40: #{tpu_custom_call.1} parent=35 // pred_fallthru
          _
      $region36: #{tpu_custom_call.1} parent=5 // pred_fallthru
        _
    $region6: #{tpu_custom_call.1} parent=1 // loop_footer
      %s17 = sadd.s32 1, %s13
    $region7: #{tpu_custom_call.1} parent=1 // loop_footer_branch
      %12 = sbr.rel target = $region3
    $region8: #{tpu_custom_call.1} parent=1 // loop_exit
      _
    %453 = vsyncpa [#allocation3], 1
    %s454 = scalar_lea.sflag [#allocation3], 1
    %455 = vsyncpa %s454, 1
    %456 = vsyncpa [#allocation4], 1
    %s457 = scalar_lea.sflag [#allocation4], 1
    %458 = vsyncpa %s457, 1

</llo_original>
